<compile_context>
chip_gen: v7x
topology: tpu7x:2x2x1
jax: 0.10.0
libtpu: 0.0.40
codegen_flags: <defaults>
</compile_context>

<pallas_src>
import functools
import math

import jax
import jax.numpy as jnp
from jax.experimental import pallas as pl
from jax.experimental.pallas import tpu as pltpu


def _round_up(x, m):
    return (x + m - 1) // m * m


def _detect_wide_mxu():
    # v6e / v7x have 256-wide MXUs; v5e is 128-wide. Fall back to 128 if unsure.
    try:
        kind = jax.devices()[0].device_kind.lower()
        return ("v6" in kind) or ("v7" in kind)
    except Exception:
        return False


_WIDE_MXU = _detect_wide_mxu()


# ----------------------------------------------------------------------------
# Pallas kernels
# ----------------------------------------------------------------------------
def _matmul_kernel(a_ref, w_ref, b_ref, o_ref, *, relu):
    # bf16 operands, f32 accumulation on the MXU; bias (folded BN) + ReLU fused.
    acc = jnp.dot(a_ref[...], w_ref[...], preferred_element_type=jnp.float32)
    acc = acc + b_ref[...].astype(jnp.float32)     # (1, TN) broadcasts
    if relu:
        acc = jnp.maximum(acc, 0.0)
    o_ref[...] = acc.astype(o_ref.dtype)


def _matmul_res_kernel(a_ref, w_ref, b_ref, r_ref, o_ref):
    # conv3 epilogue: bias + residual add + ReLU fused into the matmul.
    acc = jnp.dot(a_ref[...], w_ref[...], preferred_element_type=jnp.float32)
    acc = acc + b_ref[...].astype(jnp.float32) + r_ref[...].astype(jnp.float32)
    o_ref[...] = jnp.maximum(acc, 0.0).astype(o_ref.dtype)


def _max_reduce_kernel(x_ref, o_ref, *, count):
    # x_ref: (count, TR, C) -> elementwise max over the leading (tap) axis.
    acc = x_ref[0]
    for k in range(1, count):
        acc = jnp.maximum(acc, x_ref[k])
    o_ref[...] = acc


def _avgpool_kernel(x_ref, o_ref):
    # x_ref: (N, HW, TC) -> mean over the spatial axis, f32 accumulate.
    x = x_ref[...].astype(jnp.float32)
    o_ref[...] = jnp.mean(x, axis=1).astype(o_ref.dtype)


# ----------------------------------------------------------------------------
# Pallas matmul wrapper (bias + optional residual + optional ReLU)
# ----------------------------------------------------------------------------
def _pick_tiles(M, N):
    tm_cap, tn_cap = (256, 256) if _WIDE_MXU else (128, 128)
    tm = min(tm_cap, _round_up(M, 8))     # don't pad tiny deep-layer M to 128
    if N % tn_cap == 0:
        tn = tn_cap
    elif N % 128 == 0:
        tn = 128
    else:
        tn = N                            # block == full lane extent (legal)
    return tm, tn


def matmul_bias_act(a, w, b, residual=None, relu=True, out_dtype=jnp.bfloat16):
    """(M,K) @ (K,N) + b [+ residual] [ReLU]; bf16 operands, f32 accumulation.

    K is kept whole per tile (max 4608 for ResNet-50 -> ~1.2 MB bf16 per
    operand tile at TM/TN=128, well inside scoped VMEM on all generations).
    """
    M, K = a.shape
    N = w.shape[1]
    tm, tn = _pick_tiles(M, N)
    Mp = _round_up(M, tm)

    a_p = a.astype(jnp.bfloat16)
    if Mp != M:
        a_p = jnp.pad(a_p, ((0, Mp - M), (0, 0)))
    w_p = w.astype(jnp.bfloat16)
    b_p = b.reshape(1, N).astype(jnp.float32)

    in_specs = [
        pl.BlockSpec((tm, K), lambda i, j: (i, 0)),
        pl.BlockSpec((K, tn), lambda i, j: (0, j)),
        pl.BlockSpec((1, tn), lambda i, j: (0, j)),
    ]
    args = [a_p, w_p, b_p]
    if residual is not None:
        r_p = residual.astype(jnp.bfloat16)
        if Mp != M:
            r_p = jnp.pad(r_p, ((0, Mp - M), (0, 0)))
        in_specs.append(pl.BlockSpec((tm, tn), lambda i, j: (i, j)))
        args.append(r_p)
        kernel = _matmul_res_kernel
    else:
        kernel = functools.partial(_matmul_kernel, relu=relu)

    out = pl.pallas_call(
        kernel,
        out_shape=jax.ShapeDtypeStruct((Mp, N), out_dtype),
        grid=(Mp // tm, N // tn),
        in_specs=in_specs,
        out_specs=pl.BlockSpec((tm, tn), lambda i, j: (i, j)),
        compiler_params=pltpu.CompilerParams(
            dimension_semantics=("parallel", "parallel")),
    )(*args)
    return out[:M] if Mp != M else out


# ----------------------------------------------------------------------------
# Conv / pooling glue (im2col in plain JAX, matmul/reduction in Pallas)
# ----------------------------------------------------------------------------
def _extract_patches(x, kh, kw, stride, pad):
    N, H, W, C = x.shape
    if kh == 1 and kw == 1 and pad == 0:
        xs = x[:, ::stride, ::stride, :]          # no im2col needed for 1x1
        return xs, xs.shape[1], xs.shape[2]
    xp = jnp.pad(x, ((0, 0), (pad, pad), (pad, pad), (0, 0)))
    Hp, Wp = H + 2 * pad, W + 2 * pad
    oh = (Hp - kh) // stride + 1
    ow = (Wp - kw) // stride + 1
    cols = []
    for i in range(kh):
        for j in range(kw):
            cols.append(
                xp[:, i:i + stride * (oh - 1) + 1:stride,
                   j:j + stride * (ow - 1) + 1:stride, :])
    # (N, oh, ow, kh*kw, C) -> (N, oh, ow, kh*kw*C); matches weight (kh,kw,C,Cout)
    patches = jnp.stack(cols, axis=3).reshape(N, oh, ow, kh * kw * C)
    return patches, oh, ow


@functools.partial(jax.jit, static_argnames=("stride", "pad", "relu"))
def conv2d(x, w, b, stride, pad, relu):
    # x: (N,H,W,Cin) NHWC bf16, w: (KH,KW,Cin,Cout) bf16 (BN folded), b: (Cout,)
    N = x.shape[0]
    KH, KW, Cin, Cout = w.shape
    patches, oh, ow = _extract_patches(x, KH, KW, stride, pad)
    a = patches.reshape(N * oh * ow, KH * KW * Cin)
    out = matmul_bias_act(a, w.reshape(KH * KW * Cin, Cout), b, relu=relu)
    return out.reshape(N, oh, ow, Cout)


@jax.jit
def conv2d_1x1_add_relu(x, w, b, residual):
    # 1x1 stride-1 conv + bias + residual add + ReLU in a single Pallas call.
    N, H, W, Cin = x.shape
    Cout = w.shape[-1]
    a = x.reshape(N * H * W, Cin)
    r = residual.reshape(N * H * W, Cout)
    out = matmul_bias_act(a, w.reshape(Cin, Cout), b, residual=r)
    return out.reshape(N, H, W, Cout)


@jax.jit
def maxpool_3x3_s2(x):
    N, H, W, C = x.shape
    k, stride, pad = 3, 2, 1
    xp = jnp.pad(x, ((0, 0), (pad, pad), (pad, pad), (0, 0)),
                 constant_values=-jnp.inf)
    oh = (H + 2 * pad - k) // stride + 1
    ow = (W + 2 * pad - k) // stride + 1
    slices = [xp[:, i:i + stride * (oh - 1) + 1:stride,
                 j:j + stride * (ow - 1) + 1:stride, :]
              for i in range(k) for j in range(k)]
    stacked = jnp.stack(slices, axis=0).reshape(k * k, N * oh * ow, C)
    M = N * oh * ow
    tr = min(512, _round_up(M, 8))
    Mp = _round_up(M, tr)
    if Mp != M:
        stacked = jnp.pad(stacked, ((0, 0), (0, Mp - M), (0, 0)))
    out = pl.pallas_call(
        functools.partial(_max_reduce_kernel, count=k * k),
        out_shape=jax.ShapeDtypeStruct((Mp, C), x.dtype),
        grid=(Mp // tr,),
        in_specs=[pl.BlockSpec((k * k, tr, C), lambda i: (0, i, 0))],
        out_specs=pl.BlockSpec((tr, C), lambda i: (i, 0)),
        compiler_params=pltpu.CompilerParams(dimension_semantics=("parallel",)),
    )(stacked)
    return out[:M].reshape(N, oh, ow, C)


@jax.jit
def global_avg_pool(x):
    # AdaptiveAvgPool2d((1,1)) + flatten: (N,H,W,C) -> (N,C), gridded over C.
    N, H, W, C = x.shape
    HW = H * W
    xr = x.reshape(N, HW, C)
    tc = 256 if C % 256 == 0 else C
    return pl.pallas_call(
        _avgpool_kernel,
        out_shape=jax.ShapeDtypeStruct((N, C), jnp.bfloat16),
        grid=(C // tc,),
        in_specs=[pl.BlockSpec((N, HW, tc), lambda j: (0, 0, j))],
        out_specs=pl.BlockSpec((N, tc), lambda j: (0, j)),
        compiler_params=pltpu.CompilerParams(dimension_semantics=("parallel",)),
    )(xr)


@jax.jit
def linear(x, w, b):
    return matmul_bias_act(x, w, b, relu=False, out_dtype=jnp.float32)


# ----------------------------------------------------------------------------
# Deterministic synthetic ResNet-50 parameters (BatchNorm folded into convs)
# ----------------------------------------------------------------------------
class KeyGen:
    def __init__(self, seed):
        self.key = jax.random.PRNGKey(seed)

    def __call__(self):
        self.key, sub = jax.random.split(self.key)
        return sub


def make_conv_bn(kg, kh, kw, cin, cout):
    w = jax.random.normal(kg(), (kh, kw, cin, cout), jnp.float32) * math.sqrt(
        2.0 / (kh * kw * cin))
    gamma = jax.random.uniform(kg(), (cout,), minval=0.8, maxval=1.2)
    beta = jax.random.normal(kg(), (cout,)) * 0.05
    mean = jax.random.normal(kg(), (cout,)) * 0.05
    var = jax.random.uniform(kg(), (cout,), minval=0.9, maxval=1.1)
    s = gamma / jnp.sqrt(var + 1e-5)          # eval-mode BN fold
    # Pre-cast once: bf16 MXU operand weights, f32 bias (added post-accumulate).
    return {"w": (w * s).astype(jnp.bfloat16),
            "b": (beta - mean * s).astype(jnp.float32)}


def make_bottleneck(kg, cin, planes, stride):
    p = {
        "conv1": make_conv_bn(kg, 1, 1, cin, planes),
        "conv2": make_conv_bn(kg, 3, 3, planes, planes),
        "conv3": make_conv_bn(kg, 1, 1, planes, planes * 4),
        "stride": stride,
    }
    if stride != 1 or cin != planes * 4:
        p["down"] = make_conv_bn(kg, 1, 1, cin, planes * 4)
    return p


def make_encoder_params(seed, embed_size):
    kg = KeyGen(seed)
    params = {"conv1": make_conv_bn(kg, 7, 7, 3, 64), "layers": []}
    cin = 64
    for planes, blocks, stride in [(64, 3, 1), (128, 4, 2), (256, 6, 2), (512, 3, 2)]:
        layer = []
        for bi in range(blocks):
            s = stride if bi == 0 else 1
            layer.append(make_bottleneck(kg, cin, planes, s))
            cin = planes * 4
        params["layers"].append(layer)
    # self.embed = nn.Linear(2048, embed_size)
    params["embed"] = {
        "w": (jax.random.normal(kg(), (2048, embed_size), jnp.float32)
              * (1.0 / math.sqrt(2048))).astype(jnp.bfloat16),
        "b": (jax.random.normal(kg(), (embed_size,), jnp.float32) * 0.01
              ).astype(jnp.float32),
    }
    return params


# ----------------------------------------------------------------------------
# Forward pass (EncoderCNN.forward)
# ----------------------------------------------------------------------------
def bottleneck_fwd(x, p):
    stride = p["stride"]
    out = conv2d(x, p["conv1"]["w"], p["conv1"]["b"], stride=1, pad=0, relu=True)
    out = conv2d(out, p["conv2"]["w"], p["conv2"]["b"], stride=stride, pad=1,
                 relu=True)
    if "down" in p:
        identity = conv2d(x, p["down"]["w"], p["down"]["b"], stride=stride,
                          pad=0, relu=False)
    else:
        identity = x
    # conv3 (1x1) + BN bias + residual add + ReLU fused in one Pallas matmul.
    return conv2d_1x1_add_relu(out, p["conv3"]["w"], p["conv3"]["b"], identity)


def encoder_cnn_forward(images_nchw, params):
    # images_nchw: (N, 3, H, W) float32, like the PyTorch module's input.
    x = jnp.transpose(images_nchw, (0, 2, 3, 1)).astype(jnp.bfloat16)  # NHWC
    x = conv2d(x, params["conv1"]["w"], params["conv1"]["b"], stride=2, pad=3,
               relu=True)
    x = maxpool_3x3_s2(x)
    for layer in params["layers"]:
        for blk in layer:
            x = bottleneck_fwd(x, blk)
    feats = global_avg_pool(x)                     # (N, 2048)
    # self.embed(features)
    return linear(feats, params["embed"]["w"], params["embed"]["b"])


# ----------------------------------------------------------------------------
if __name__ == "__main__":
    embed_size = 32
    batch = 2
    params = make_encoder_params(seed=0, embed_size=embed_size)

    images = jax.random.normal(jax.random.PRNGKey(0), (batch, 3, 64, 64),
                               jnp.float32)
    features = encoder_cnn_forward(images, params)
    features = jax.block_until_ready(features)
    assert features.shape == (batch, embed_size), features.shape
    assert bool(jnp.all(jnp.isfinite(features))), "non-finite output"
    print("KERNEL_OK")
</pallas_src>

<mosaic_0001>
module attributes {stable_mosaic.version = 11 : i64} {
  func.func @_matmul_kernel(%arg0: i32, %arg1: i32, %arg2: memref<128x147xbf16, #tpu.memory_space<vmem>>, %arg3: memref<147x64xbf16, #tpu.memory_space<vmem>>, %arg4: memref<1x64xf32, #tpu.memory_space<vmem>>, %arg5: memref<128x64xbf16, #tpu.memory_space<vmem>>) attributes {dimension_semantics = [#tpu.dimension_semantics<parallel>, #tpu.dimension_semantics<parallel>], iteration_bounds = array<i64: 16, 1>, scalar_prefetch = 0 : i64, scratch_operands = 0 : i64, tpu.core_type = #tpu.core_type<tc>, window_params = [{transform_indices = @transform_0, window_bounds = array<i64: 128, 147>}, {transform_indices = @transform_1, window_bounds = array<i64: 147, 64>}, {transform_indices = @transform_2, window_bounds = array<i64: 1, 64>}, {transform_indices = @transform_3, window_bounds = array<i64: 128, 64>}]} {
    %c0 = arith.constant 0 : index
    %c0_0 = arith.constant 0 : index
    %0 = vector.load %arg2[%c0, %c0_0] : memref<128x147xbf16, #tpu.memory_space<vmem>>, vector<128x147xbf16>
    %c0_1 = arith.constant 0 : index
    %c0_2 = arith.constant 0 : index
    %1 = vector.load %arg3[%c0_1, %c0_2] : memref<147x64xbf16, #tpu.memory_space<vmem>>, vector<147x64xbf16>
    %cst = arith.constant dense<0.000000e+00> : vector<128x64xf32>
    %2 = tpu.matmul %0, %1, %cst {dimension_numbers = #tpu.dot_dimension_numbers<[1], [0], [0], [1], [0, 0, 1, 1], [], []>} : vector<128x147xbf16>, vector<147x64xbf16>, vector<128x64xf32> -> vector<128x64xf32>
    %c0_3 = arith.constant 0 : index
    %c0_4 = arith.constant 0 : index
    %3 = vector.load %arg4[%c0_3, %c0_4] : memref<1x64xf32, #tpu.memory_space<vmem>>, vector<1x64xf32>
    %4 = vector.broadcast %3 : vector<1x64xf32> to vector<128x64xf32>
    %5 = arith.addf %2, %4 : vector<128x64xf32>
    %cst_5 = arith.constant 0.000000e+00 : f32
    %6 = vector.broadcast %cst_5 : f32 to vector<128x64xf32>
    %7 = arith.maximumf %5, %6 : vector<128x64xf32>
    %8 = arith.truncf %7 : vector<128x64xf32> to vector<128x64xbf16>
    %c0_6 = arith.constant 0 : index
    %c0_7 = arith.constant 0 : index
    %9 = vector.load %arg5[%c0_6, %c0_7] : memref<128x64xbf16, #tpu.memory_space<vmem>>, vector<128x64xbf16>
    tpu.vector_store %arg5[%c0_6, %c0_7], %8 {strides = array<i32>} : memref<128x64xbf16, #tpu.memory_space<vmem>>, vector<128x64xbf16>,
    return
  }
  func.func @transform_0(%arg0: i32, %arg1: i32) -> (i32, i32) {
    %c0_i32 = arith.constant 0 : i32
    %c0_i32_0 = arith.constant 0 : i32
    return %arg0, %c0_i32 : i32, i32
  }
  func.func @transform_1(%arg0: i32, %arg1: i32) -> (i32, i32) {
    %c0_i32 = arith.constant 0 : i32
    %c0_i32_0 = arith.constant 0 : i32
    return %c0_i32, %arg1 : i32, i32
  }
  func.func @transform_2(%arg0: i32, %arg1: i32) -> (i32, i32) {
    %c0_i32 = arith.constant 0 : i32
    %c0_i32_0 = arith.constant 0 : i32
    return %c0_i32, %arg1 : i32, i32
  }
  func.func @transform_3(%arg0: i32, %arg1: i32) -> (i32, i32) {
    %c0_i32 = arith.constant 0 : i32
    return %arg0, %arg1 : i32, i32
  }
}

</mosaic_0001>

<llo_original>
// kernel: conv2d.1
$region0: #{conv2d.1}
  #allocation0 [shape = 'u32[]', space=smem, size = 0x4, offset = 0x4, fixed_abs, tag = 'smem constant byte address 0x4 - core index']
  #allocation1 [shape = 'u32[144,128]{1,0:T(1,128)}', space=vmem, size = 0x12000, scoped, tag = 'internal scratch']
  %s0 = inlined_call_operand.vmem [shape: bf16[2048,147], index: 0, kind: input, shape index: {}]
  %s1 = inlined_call_operand.vmem [shape: bf16[147,64], index: 1, kind: input, shape index: {}]
  %s2 = inlined_call_operand.vmem [shape: f32[1,64], index: 2, kind: input, shape index: {}]
  %s3 = inlined_call_operand.hbm [shape: bf16[2048,64], index: 3, kind: output, shape index: {}]
  %s4 = sld [smem:[#allocation0]]
  $region45: #{conv2d.1} parent=0
    _
  %s6 = ssub.s32 1, %s4
  %s7 = scalar_select 0, %s6, %s4
  $region1: #{conv2d.1} parent=0
    #allocation2 [shape = 'u8[65536]{0}', space=vmem, size = 0x10000, scoped, tag = 'output window, operand 0']
    #allocation3 [shape = 's32[2]{0}', space=sflag, size = 0x8, scoped, tag = 'scoped memory for conv2d.1']
    %8 = vsyncpa [#allocation3], 0
    %s9 = scalar_lea.sflag [#allocation3], 1
    %10 = vsyncpa %s9, 0
    loop: start=0, step=1, limit=18
    $region2: #{conv2d.1} parent=1 // loop_pre_header
      _
    $region3: #{conv2d.1} parent=1 // loop_header
      %s12 = sphi 0, %s16
      %p13 = scmp.ge.s32.totalorder %s12, 18
      %s19 = sphi 0, %s31
      %s20 = sphi 0, %s27
      %s21 = sphi 0, %s19
      %s22 = sphi 0, %s20
      %s23 = sphi 0, %s21
      %s24 = sphi 0, %s22
      %s34 = sphi 0, %s36
      %s37 = sphi 0, %s34
      %s38 = sphi 0, %s37
      %s54 = sphi 0, %s38
      %s60 = sphi 0, %s62
      %s63 = sphi 0, %s60
      %s64 = sphi 0, %s63
      %s80 = sphi 0, %s64
      %s86 = sphi 0, %s88
      %s89 = sphi 0, %s86
      %s90 = sphi 0, %s89
      %s106 = sphi 0, %s90
      %s114 = sphi 0, %s116
      %s117 = sphi 0, %s114
      %s118 = sphi 0, %s117
      %s134 = sphi 0, %s118
    $region4: #{conv2d.1} parent=1 // loop_header_branch
      %15 = sbr.rel (%p13) target = $region8
    $region5: #{conv2d.1} parent=1 // loop_body
      %s17 = ssub.s32 %s12, 1
      %s18 = ssub.s32 %s12, 2
      %s25 = sadd.s32 1, %s20
      %p26 = scmp.ge.s32.totalorder %s25, 1
      %s27 = scalar_select %p26, 0, %s25
      %s28 = sadd.s32 1, %s19
      %s29 = scalar_select %p26, %s28, %s19
      %p30 = scmp.ge.s32.totalorder %s29, 16
      %s31 = scalar_select %p30, 0, %s29
      %s32 = ssub.s32 %s19, %s31
      %p33 = scmp.eq.s32.totalorder %s32, 0
      %s35 = sadd.s32 %s34, 1
      %s36 = scalar_select %p33, %s34, %s35
      %p39 = pneg %p33
      %p40 = scmp.eq.s32.totalorder %s12, 15
      %p41 = por %p39, %p40
      %p42 = scmp.ne.s32.totalorder %s34, %s37
      %p43 = scmp.eq.s32.totalorder %s12, 0
      %p44 = por %p42, %p43
      %p45 = scmp.ne.s32.totalorder %s34, %s37
      %p46 = scmp.eq.s32.totalorder %s17, 15
      %p47 = por %p45, %p46
      %p48 = scmp.ne.s32.totalorder %s37, %s38
      %p49 = scmp.eq.s32.totalorder %s17, 0
      %p50 = por %p48, %p49
      %p51 = scmp.ne.s32.totalorder %s37, %s38
      %p52 = scmp.eq.s32.totalorder %s18, 15
      %p53 = por %p51, %p52
      %p55 = scmp.ne.s32.totalorder %s38, %s54
      %p56 = scmp.eq.s32.totalorder %s18, 0
      %p57 = por %p55, %p56
      %s58 = ssub.s32 %s20, %s27
      %p59 = scmp.eq.s32.totalorder %s58, 0
      %s61 = sadd.s32 %s60, 1
      %s62 = scalar_select %p59, %s60, %s61
      %p65 = pneg %p59
      %p66 = scmp.eq.s32.totalorder %s12, 15
      %p67 = por %p65, %p66
      %p68 = scmp.ne.s32.totalorder %s60, %s63
      %p69 = scmp.eq.s32.totalorder %s12, 0
      %p70 = por %p68, %p69
      %p71 = scmp.ne.s32.totalorder %s60, %s63
      %p72 = scmp.eq.s32.totalorder %s17, 15
      %p73 = por %p71, %p72
      %p74 = scmp.ne.s32.totalorder %s63, %s64
      %p75 = scmp.eq.s32.totalorder %s17, 0
      %p76 = por %p74, %p75
      %p77 = scmp.ne.s32.totalorder %s63, %s64
      %p78 = scmp.eq.s32.totalorder %s18, 15
      %p79 = por %p77, %p78
      %p81 = scmp.ne.s32.totalorder %s64, %s80
      %p82 = scmp.eq.s32.totalorder %s18, 0
      %p83 = por %p81, %p82
      %s84 = ssub.s32 %s20, %s27
      %p85 = scmp.eq.s32.totalorder %s84, 0
      %s87 = sadd.s32 %s86, 1
      %s88 = scalar_select %p85, %s86, %s87
      %p91 = pneg %p85
      %p92 = scmp.eq.s32.totalorder %s12, 15
      %p93 = por %p91, %p92
      %p94 = scmp.ne.s32.totalorder %s86, %s89
      %p95 = scmp.eq.s32.totalorder %s12, 0
      %p96 = por %p94, %p95
      %p97 = scmp.ne.s32.totalorder %s86, %s89
      %p98 = scmp.eq.s32.totalorder %s17, 15
      %p99 = por %p97, %p98
      %p100 = scmp.ne.s32.totalorder %s89, %s90
      %p101 = scmp.eq.s32.totalorder %s17, 0
      %p102 = por %p100, %p101
      %p103 = scmp.ne.s32.totalorder %s89, %s90
      %p104 = scmp.eq.s32.totalorder %s18, 15
      %p105 = por %p103, %p104
      %p107 = scmp.ne.s32.totalorder %s90, %s106
      %p108 = scmp.eq.s32.totalorder %s18, 0
      %p109 = por %p107, %p108
      %s110 = ssub.s32 %s19, %s31
      %s111 = ssub.s32 %s20, %s27
      %s112 = sor.u32 %s110, %s111
      %p113 = scmp.eq.s32.totalorder %s112, 0
      %s115 = sadd.s32 %s114, 1
      %s116 = scalar_select %p113, %s114, %s115
      %p119 = pneg %p113
      %p120 = scmp.eq.s32.totalorder %s12, 15
      %p121 = por %p119, %p120
      %p122 = scmp.ne.s32.totalorder %s114, %s117
      %p123 = scmp.eq.s32.totalorder %s12, 0
      %p124 = por %p122, %p123
      %p125 = scmp.ne.s32.totalorder %s114, %s117
      %p126 = scmp.eq.s32.totalorder %s17, 15
      %p127 = por %p125, %p126
      %p128 = scmp.ne.s32.totalorder %s117, %s118
      %p129 = scmp.eq.s32.totalorder %s17, 0
      %p130 = por %p128, %p129
      %p131 = scmp.ne.s32.totalorder %s117, %s118
      %p132 = scmp.eq.s32.totalorder %s18, 15
      %p133 = por %p131, %p132
      %p135 = scmp.ne.s32.totalorder %s118, %s134
      %p136 = scmp.eq.s32.totalorder %s18, 0
      %p137 = por %p135, %p136
      %p138 = scmp.le.s32.totalorder 1, %s12
      %p139 = scmp.lt.s32.totalorder %s12, 17
      %p140 = pnand %p138, %p139
      %p141 = pneg %p140
      // Predicated region
      $region9: #{conv2d.1} parent=5 // pred_check
        _
      $region10: #{conv2d.1} parent=5 // pred_check_branch
        %143 = sbr.rel (%p140) target = $region12
      $region11: #{conv2d.1} parent=5 // pred_region
        %s144 = ssub.s32 %s12, 1
        // Predicated region
        $region13: #{conv2d.1} parent=11 // pred_check
          %p145 = pneg %p76
        $region14: #{conv2d.1} parent=11 // pred_check_branch
          %147 = sbr.rel (%p145) target = $region16
        $region15: #{conv2d.1} parent=11 // pred_region
          %p148 = scmp.lt.s32.totalorder %s22, 0
          %s149 = scalar_select %p148, %s22, 0
          %s150 = smul.addr %s149, 4
          %s151 = scalar_lea.vmem %s1, %s150
        $region16: #{conv2d.1} parent=11 // pred_fallthru
          _
        // Predicated region
        $region17: #{conv2d.1} parent=11 // pred_check
          %p152 = pneg %p102
        $region18: #{conv2d.1} parent=11 // pred_check_branch
          %154 = sbr.rel (%p152) target = $region20
        $region19: #{conv2d.1} parent=11 // pred_region
          %p155 = scmp.lt.s32.totalorder %s22, 0
          %s156 = scalar_select %p155, %s22, 0
          %s157 = scalar_lea.vmem %s2, %s156
        $region20: #{conv2d.1} parent=11 // pred_fallthru
          _
      $region12: #{conv2d.1} parent=5 // pred_fallthru
        _
      %p158 = scmp.lt.s32.totalorder %s12, 16
      // Predicated region
      $region21: #{conv2d.1} parent=5 // pred_check
        %p159 = pneg %p158
      $region22: #{conv2d.1} parent=5 // pred_check_branch
        %161 = sbr.rel (%p159) target = $region24
      $region23: #{conv2d.1} parent=5 // pred_region
        // Predicated region
        $region25: #{conv2d.1} parent=23 // pred_check
          %p162 = pneg %p44
        $region26: #{conv2d.1} parent=23 // pred_check_branch
          %164 = sbr.rel (%p162) target = $region28
        $region27: #{conv2d.1} parent=23 // pred_region
          %s165 = smul.u32 16, %s19
          %p166 = scmp.lt.s32.totalorder %s165, 255
          %s167 = scalar_select %p166, %s165, 255
          %s168 = smul.addr %s167, 2
          %s169 = smul.addr %s168, 4
          %s170 = scalar_lea.vmem %s0, %s169
          %s171 = smul.u32 16, %s19
        $region28: #{conv2d.1} parent=23 // pred_fallthru
          _
      $region24: #{conv2d.1} parent=5 // pred_fallthru
        _
      %p172 = scmp.le.s32.totalorder 1, %s12
      %p173 = scmp.lt.s32.totalorder %s12, 17
      %p174 = pnand %p172, %p173
      %p175 = pneg %p174
      // Predicated region
      $region29: #{conv2d.1} parent=5 // pred_check
        _
      $region30: #{conv2d.1} parent=5 // pred_check_branch
        %177 = sbr.rel (%p174) target = $region32
      $region31: #{conv2d.1} parent=5 // pred_region
        %s178 = ssub.s32 %s12, 1
        %s179 = smul.u32 16, %s21
        %p180 = scmp.lt.s32.totalorder %s179, 255
        %s181 = scalar_select %p180, %s179, 255
        %s182 = smul.addr %s181, 2
        %s183 = smul.addr %s182, 4
        %s184 = scalar_lea.vmem %s0, %s183
        %p185 = pneg %p50
        %p186 = pneg %p47
        %p187 = scmp.lt.s32.totalorder %s22, 0
        %s188 = scalar_select %p187, %s22, 0
        %s189 = smul.addr %s188, 4
        %s190 = scalar_lea.vmem %s1, %s189
        %p191 = pneg %p76
        %p192 = pneg %p73
        %p193 = scmp.lt.s32.totalorder %s22, 0
        %s194 = scalar_select %p193, %s22, 0
        %s195 = scalar_lea.vmem %s2, %s194
        %p196 = pneg %p102
        %p197 = pneg %p99
        %p198 = pneg %p130
        %p199 = pneg %p127
        %s200 = sand.u32 %s117, 1
        %s201 = scalar_lea.sflag [#allocation3], %s200
        %s202 = sand.u32 %s117, 1
        %s203 = smul.addr %s202, 64
        %s204 = scalar_lea.vmem [#allocation2], %s203
        %s205 = smul.u32 16, %s21
        %p206 = scmp.lt.s32.totalorder %s205, 255
        %s207 = scalar_select %p206, %s205, 255
        %s208 = smul.addr %s207, 2
        %s209 = smul.addr %s208, 4
        %s210 = scalar_lea.vmem %s0, %s209
        %s211 = smul.u32 16, %s21
        %p212 = scmp.lt.s32.totalorder %s22, 0
        %s213 = scalar_select %p212, %s22, 0
        %s214 = smul.addr %s213, 4
        %s215 = scalar_lea.vmem %s1, %s214
        %p216 = scmp.lt.s32.totalorder %s22, 0
        %s217 = scalar_select %p216, %s22, 0
        %s218 = scalar_lea.vmem %s2, %s217
        %s219 = smul.u32 16, %s21
        %v221 = vld [vmem:[%s210] sm:$0xff]
        %v222 = vld [vmem:[%s210 + $0x8] sm:$0xff]
        %v223 = vld [vmem:[%s210 + $0x10] sm:$0xff]
        %v224 = vld [vmem:[%s210 + $0x18] sm:$0xff]
        %v225 = vld [vmem:[%s210 + $0x20] sm:$0xff]
        %v226 = vld [vmem:[%s210 + $0x28] sm:$0xff]
        %v227 = vld [vmem:[%s210 + $0x30] sm:$0xff]
        %v228 = vld [vmem:[%s210 + $0x38] sm:$0xff]
        %v229 = vld [vmem:[%s210 + $0x40] sm:$0xff]
        %v230 = vld [vmem:[%s210 + $0x48] sm:$0xff]
        %v231 = vld [vmem:[%s210 + $0x50] sm:$0xff]
        %v232 = vld [vmem:[%s210 + $0x58] sm:$0xff]
        %v233 = vld [vmem:[%s210 + $0x60] sm:$0xff]
        %v234 = vld [vmem:[%s210 + $0x68] sm:$0xff]
        %v235 = vld [vmem:[%s210 + $0x70] sm:$0xff]
        %v236 = vld [vmem:[%s210 + $0x78] sm:$0xff]
        %v237 = vld [vmem:[%s215] sm:$0xf]
        %v238 = vld [vmem:[%s215 + $0x4] sm:$0xf]
        %v239 = vld [vmem:[%s215 + $0x8] sm:$0xf]
        %v240 = vld [vmem:[%s215 + $0xc] sm:$0xf]
        %v241 = vld [vmem:[%s215 + $0x10] sm:$0xf]
        %v242 = vld [vmem:[%s215 + $0x14] sm:$0xf]
        %v243 = vld [vmem:[%s215 + $0x18] sm:$0xf]
        %v244 = vld [vmem:[%s215 + $0x1c] sm:$0xf]
        %v245 = vld [vmem:[%s215 + $0x20] sm:$0xf]
        %v246 = vld [vmem:[%s215 + $0x24] sm:$0xf]
        %v247 = vld [vmem:[%s215 + $0x28] sm:$0xf]
        %v248 = vld [vmem:[%s215 + $0x2c] sm:$0xf]
        %v249 = vld [vmem:[%s215 + $0x30] sm:$0xf]
        %v250 = vld [vmem:[%s215 + $0x34] sm:$0xf]
        %v251 = vld [vmem:[%s215 + $0x38] sm:$0xf]
        %v252 = vld [vmem:[%s215 + $0x3c] sm:$0xf]
        %v253 = vld [vmem:[%s215 + $0x40] sm:$0xf]
        %v254 = vld [vmem:[%s215 + $0x44] sm:$0xf]
        %v255 = vld [vmem:[%s215 + $0x48] sm:$0x3]
        %v256 = vld [vmem:[%s218] sm:$0x1]
        %v258 = vlaneseq
        %v259 = vshrl.u32 %v258, 7
        %v260 = vsub.s32 0, %v259
        %v261 = vrot.slane %v256, %v260
        %v279 = vunpack.c.l.b16 %v221
        %v280 = vunpack.c.h.b16 %v221
        %v281 = vunpack.c.l.b16 %v222
        %v282 = vunpack.c.h.b16 %v222
        %v283 = vunpack.c.l.b16 %v223
        %v284 = vunpack.c.h.b16 %v223
        %v285 = vunpack.c.l.b16 %v224
        %v286 = vunpack.c.h.b16 %v224
        %v287 = vunpack.c.l.b16 %v225
        %v288 = vunpack.c.h.b16 %v225
        %v289 = vunpack.c.l.b16 %v226
        %v290 = vunpack.c.h.b16 %v226
        %v291 = vunpack.c.l.b16 %v227
        %v292 = vunpack.c.h.b16 %v227
        %v293 = vunpack.c.l.b16 %v228
        %v294 = vunpack.c.h.b16 %v228
        %v295 = vunpack.c.l.b16 %v229
        %v296 = vunpack.c.h.b16 %v229
        %v297 = vunpack.c.l.b16 %v230
        %v298 = vunpack.c.h.b16 %v230
        %v299 = vunpack.c.l.b16 %v231
        %v300 = vunpack.c.h.b16 %v231
        %v301 = vunpack.c.l.b16 %v232
        %v302 = vunpack.c.h.b16 %v232
        %v303 = vunpack.c.l.b16 %v233
        %v304 = vunpack.c.h.b16 %v233
        %v305 = vunpack.c.l.b16 %v234
        %v306 = vunpack.c.h.b16 %v234
        %v307 = vunpack.c.l.b16 %v235
        %v308 = vunpack.c.h.b16 %v235
        %v309 = vunpack.c.l.b16 %v236
        %v310 = vunpack.c.h.b16 %v236
        %v311 = vpack.c.b16 %v281, %v279
        %v312 = vpack.c.b16 %v282, %v280
        %v313 = vpack.c.b16 %v285, %v283
        %v314 = vpack.c.b16 %v286, %v284
        %v315 = vpack.c.b16 %v289, %v287
        %v316 = vpack.c.b16 %v290, %v288
        %v317 = vpack.c.b16 %v293, %v291
        %v318 = vpack.c.b16 %v294, %v292
        %v319 = vpack.c.b16 %v297, %v295
        %v320 = vpack.c.b16 %v298, %v296
        %v321 = vpack.c.b16 %v301, %v299
        %v322 = vpack.c.b16 %v302, %v300
        %v323 = vpack.c.b16 %v305, %v303
        %v324 = vpack.c.b16 %v306, %v304
        %v325 = vpack.c.b16 %v309, %v307
        %v326 = vpack.c.b16 %v310, %v308
        %v354 = vunpack.c.l.b16 %v237
        %v355 = vunpack.c.l.b16 %v238
        %v356 = vunpack.c.l.b16 %v239
        %v357 = vunpack.c.l.b16 %v240
        %v358 = vunpack.c.l.b16 %v241
        %v359 = vunpack.c.l.b16 %v242
        %v360 = vunpack.c.l.b16 %v243
        %v361 = vunpack.c.l.b16 %v244
        %v362 = vunpack.c.l.b16 %v245
        %v363 = vunpack.c.l.b16 %v246
        %v364 = vunpack.c.l.b16 %v247
        %v365 = vunpack.c.l.b16 %v248
        %v366 = vunpack.c.l.b16 %v249
        %v367 = vunpack.c.l.b16 %v250
        %v368 = vunpack.c.l.b16 %v251
        %v369 = vunpack.c.l.b16 %v252
        %v370 = vunpack.c.l.b16 %v253
        %v371 = vunpack.c.l.b16 %v254
        %v372 = vunpack.c.l.b16 %v255
        %v373 = vpack.c.b16 %v355, %v354
        %v374 = vpack.c.b16 %v357, %v356
        %v375 = vpack.c.b16 %v359, %v358
        %v376 = vpack.c.b16 %v361, %v360
        %v377 = vpack.c.b16 %v363, %v362
        %v378 = vpack.c.b16 %v365, %v364
        %v379 = vpack.c.b16 %v367, %v366
        %v380 = vpack.c.b16 %v369, %v368
        %v381 = vpack.c.b16 %v371, %v370
        %v382 = vpack.c.b16 %v372, %v372
        %vm392 = vcmask 154624
        %v394 = vsel %vm392, %v312, 0
        %v397 = vsel %vm392, %v314, 0
        %v400 = vsel %vm392, %v316, 0
        %v403 = vsel %vm392, %v318, 0
        %v406 = vsel %vm392, %v320, 0
        %v409 = vsel %vm392, %v322, 0
        %v412 = vsel %vm392, %v324, 0
        %v415 = vsel %vm392, %v326, 0
        %vm417 = vcmask 1040384
        %vm418 = vcmask 1041408
        %v419 = vsel %vm417, 4294967295, 65535
        %v420 = vsel %vm418, %v419, 0
        %v422 = vand.u32 %v382, %v420
        %424 = vmatprep.subr.bf16.mxu0 0
        %425 = vmatpush1.bf16.msra.mxu0 %v373
        %426 = vmatprep.subr.bf16.mxu0 0
        %427 = vmatpush1.bf16.msra.mxu0 %v374
        %428 = vmatprep.subr.bf16.mxu0 0
        %429 = vmatpush1.bf16.msra.mxu0 %v375
        %430 = vmatprep.subr.bf16.mxu0 0
        %431 = vmatpush1.bf16.msra.mxu0 %v376
        %432 = vmatprep.subr.bf16.mxu0 0
        %433 = vmatpush1.bf16.msra.mxu0 %v377
        %434 = vmatprep.subr.bf16.mxu0 0
        %435 = vmatpush1.bf16.msra.mxu0 %v378
        %436 = vmatprep.subr.bf16.mxu0 0
        %437 = vmatpush1.bf16.msra.mxu0 %v379
        %438 = vmatprep.subr.bf16.mxu0 0
        %439 = vmatpush1.bf16.msra.mxu0 %v380
        %440 = vmatprep.subr.bf16.mxu0 0
        %441 = vmatpush1.bf16.msra.mxu0 %v381
        %442 = vmatprep.subr.bf16.mxu0 0
        %443 = vmatpush1.bf16.msra.mxu0 %v422
        %444 = vmatprep.subr.bf16.mxu0 0
        %445 = vmatpush1.bf16.msra.mxu0 0
        %446 = vmatprep.subr.bf16.mxu0 0
        %447 = vmatpush1.bf16.msra.mxu0 0
        %448 = vmatprep.subr.bf16.mxu0 0
        %449 = vmatpush1.bf16.msra.mxu0 0
        %450 = vmatprep.subr.bf16.mxu0 0
        %451 = vmatpush1.bf16.msra.mxu0 0
        %452 = vmatprep.subr.bf16.mxu0 0
        %453 = vmatpush1.bf16.msra.mxu0 0
        %454 = vmatprep.subr.bf16.mxu0 0
        %455 = vmatpush1.bf16.msra.mxu0 0
        %456 = vmatprep.mubr.bf16.mxu0 %v394
        %457 = vmatmul.mubr.bf16.gmra.mrb[0].mxu0 %v311
        %v458 = vpop.f32.mrb[0].mxu0
        %v459 = vadd.f32 %v261, %v458
        %v460 = vpop.f32.mrb[0].mxu0
        %v461 = vpop.f32.mrb[0].mxu0
        %v462 = vadd.f32 %v261, %v461
        %v463 = vpop.f32.mrb[0].mxu0
        %464 = vmatprep.mubr.bf16.mxu0 %v397
        %465 = vmatmul.mubr.bf16.gmra.mrb[0].mxu0 %v313
        %v466 = vpop.f32.mrb[0].mxu0
        %v467 = vadd.f32 %v261, %v466
        %v468 = vpop.f32.mrb[0].mxu0
        %v469 = vpop.f32.mrb[0].mxu0
        %v470 = vadd.f32 %v261, %v469
        %v471 = vpop.f32.mrb[0].mxu0
        %472 = vmatprep.mubr.bf16.mxu0 %v400
        %473 = vmatmul.mubr.bf16.gmra.mrb[0].mxu0 %v315
        %v474 = vpop.f32.mrb[0].mxu0
        %v475 = vadd.f32 %v261, %v474
        %v476 = vpop.f32.mrb[0].mxu0
        %v477 = vpop.f32.mrb[0].mxu0
        %v478 = vadd.f32 %v261, %v477
        %v479 = vpop.f32.mrb[0].mxu0
        %480 = vmatprep.mubr.bf16.mxu0 %v403
        %481 = vmatmul.mubr.bf16.gmra.mrb[0].mxu0 %v317
        %v482 = vpop.f32.mrb[0].mxu0
        %v483 = vadd.f32 %v261, %v482
        %v484 = vpop.f32.mrb[0].mxu0
        %v485 = vpop.f32.mrb[0].mxu0
        %v486 = vadd.f32 %v261, %v485
        %v487 = vpop.f32.mrb[0].mxu0
        %488 = vmatprep.mubr.bf16.mxu0 %v406
        %489 = vmatmul.mubr.bf16.gmra.mrb[0].mxu0 %v319
        %v490 = vpop.f32.mrb[0].mxu0
        %v491 = vadd.f32 %v261, %v490
        %v492 = vpop.f32.mrb[0].mxu0
        %v493 = vpop.f32.mrb[0].mxu0
        %v494 = vadd.f32 %v261, %v493
        %v495 = vpop.f32.mrb[0].mxu0
        %496 = vmatprep.mubr.bf16.mxu0 %v409
        %497 = vmatmul.mubr.bf16.gmra.mrb[0].mxu0 %v321
        %v498 = vpop.f32.mrb[0].mxu0
        %v499 = vadd.f32 %v261, %v498
        %v500 = vpop.f32.mrb[0].mxu0
        %v501 = vpop.f32.mrb[0].mxu0
        %v502 = vadd.f32 %v261, %v501
        %v503 = vpop.f32.mrb[0].mxu0
        %504 = vmatprep.mubr.bf16.mxu0 %v412
        %505 = vmatmul.mubr.bf16.gmra.mrb[0].mxu0 %v323
        %v506 = vpop.f32.mrb[0].mxu0
        %v507 = vadd.f32 %v261, %v506
        %v508 = vpop.f32.mrb[0].mxu0
        %v509 = vpop.f32.mrb[0].mxu0
        %v510 = vadd.f32 %v261, %v509
        %v511 = vpop.f32.mrb[0].mxu0
        %512 = vmatprep.mubr.bf16.mxu0 %v415
        %513 = vmatmul.mubr.bf16.gmra.mrb[0].mxu0 %v325
        %v514 = vpop.f32.mrb[0].mxu0
        %v515 = vadd.f32 %v261, %v514
        %v516 = vpop.f32.mrb[0].mxu0
        %v517 = vpop.f32.mrb[0].mxu0
        %v518 = vadd.f32 %v261, %v517
        %v519 = vpop.f32.mrb[0].mxu0
        %520 = vdwg.mxu0
        %v521 = vmax.f32 %v459, 0.0
        %v522 = vmax.f32 %v462, 0.0
        %v523 = vmax.f32 %v467, 0.0
        %v524 = vmax.f32 %v470, 0.0
        %v525 = vmax.f32 %v475, 0.0
        %v526 = vmax.f32 %v478, 0.0
        %v527 = vmax.f32 %v483, 0.0
        %v528 = vmax.f32 %v486, 0.0
        %v529 = vmax.f32 %v491, 0.0
        %v530 = vmax.f32 %v494, 0.0
        %v531 = vmax.f32 %v499, 0.0
        %v532 = vmax.f32 %v502, 0.0
        %v533 = vmax.f32 %v507, 0.0
        %v534 = vmax.f32 %v510, 0.0
        %v535 = vmax.f32 %v515, 0.0
        %v536 = vmax.f32 %v518, 0.0
        %v537 = vpack.c.bf16 %v522, %v521
        %v538 = vpack.c.bf16 %v524, %v523
        %v539 = vpack.c.bf16 %v526, %v525
        %v540 = vpack.c.bf16 %v528, %v527
        %v541 = vpack.c.bf16 %v530, %v529
        %v542 = vpack.c.bf16 %v532, %v531
        %v543 = vpack.c.bf16 %v534, %v533
        %v544 = vpack.c.bf16 %v536, %v535
        %v553 = vunpack.c.l.b16 %v537
        %v554 = vunpack.c.h.b16 %v537
        %v555 = vunpack.c.l.b16 %v538
        %v556 = vunpack.c.h.b16 %v538
        %v557 = vunpack.c.l.b16 %v539
        %v558 = vunpack.c.h.b16 %v539
        %v559 = vunpack.c.l.b16 %v540
        %v560 = vunpack.c.h.b16 %v540
        %v561 = vunpack.c.l.b16 %v541
        %v562 = vunpack.c.h.b16 %v541
        %v563 = vunpack.c.l.b16 %v542
        %v564 = vunpack.c.h.b16 %v542
        %v565 = vunpack.c.l.b16 %v543
        %v566 = vunpack.c.h.b16 %v543
        %v567 = vunpack.c.l.b16 %v544
        %v568 = vunpack.c.h.b16 %v544
        %v569 = vpack.c.b16 %v553, %v553
        %v570 = vpack.c.b16 %v554, %v554
        %v571 = vpack.c.b16 %v555, %v555
        %v572 = vpack.c.b16 %v556, %v556
        %v573 = vpack.c.b16 %v557, %v557
        %v574 = vpack.c.b16 %v558, %v558
        %v575 = vpack.c.b16 %v559, %v559
        %v576 = vpack.c.b16 %v560, %v560
        %v577 = vpack.c.b16 %v561, %v561
        %v578 = vpack.c.b16 %v562, %v562
        %v579 = vpack.c.b16 %v563, %v563
        %v580 = vpack.c.b16 %v564, %v564
        %v581 = vpack.c.b16 %v565, %v565
        %v582 = vpack.c.b16 %v566, %v566
        %v583 = vpack.c.b16 %v567, %v567
        %v584 = vpack.c.b16 %v568, %v568
        %vm601 = vcmask 519168
        %602 = vst.msk [vmem:[%s204] sm:$0xf] %vm601, %v569
        %603 = vst.msk [vmem:[%s204 + $0x4] sm:$0xf] %vm601, %v570
        %604 = vst.msk [vmem:[%s204 + $0x8] sm:$0xf] %vm601, %v571
        %605 = vst.msk [vmem:[%s204 + $0xc] sm:$0xf] %vm601, %v572
        %606 = vst.msk [vmem:[%s204 + $0x10] sm:$0xf] %vm601, %v573
        %607 = vst.msk [vmem:[%s204 + $0x14] sm:$0xf] %vm601, %v574
        %608 = vst.msk [vmem:[%s204 + $0x18] sm:$0xf] %vm601, %v575
        %609 = vst.msk [vmem:[%s204 + $0x1c] sm:$0xf] %vm601, %v576
        %610 = vst.msk [vmem:[%s204 + $0x20] sm:$0xf] %vm601, %v577
        %611 = vst.msk [vmem:[%s204 + $0x24] sm:$0xf] %vm601, %v578
        %612 = vst.msk [vmem:[%s204 + $0x28] sm:$0xf] %vm601, %v579
        %613 = vst.msk [vmem:[%s204 + $0x2c] sm:$0xf] %vm601, %v580
        %614 = vst.msk [vmem:[%s204 + $0x30] sm:$0xf] %vm601, %v581
        %615 = vst.msk [vmem:[%s204 + $0x34] sm:$0xf] %vm601, %v582
        %616 = vst.msk [vmem:[%s204 + $0x38] sm:$0xf] %vm601, %v583
        %617 = vst.msk [vmem:[%s204 + $0x3c] sm:$0xf] %vm601, %v584
        %s618 = sand.u32 %s117, 1
        %s619 = scalar_lea.sflag [#allocation3], %s618
        %s620 = sand.u32 %s117, 1
        %s621 = smul.addr %s620, 64
        %s622 = scalar_lea.vmem [#allocation2], %s621
        // Predicated region
        $region33: #{conv2d.1} parent=31 // pred_check
          %p623 = pneg %p127
        $region34: #{conv2d.1} parent=31 // pred_check_branch
          %625 = sbr.rel (%p623) target = $region36
        $region35: #{conv2d.1} parent=31 // pred_region
          %s626 = smul.u32 16, %s21
          %s628 = ssub.s32 1024, 1024
          %629 = vsyncadd %s619, %s628
          %s630 = sadd.s32 %s22, %s626
          %s631 = smul.addr %s630, 64
          %s632 = scalar_lea.hbm %s3, %s631
          %s633 = sshll.u32 %s622, 4
          %s634 = int_to_ptr.vmem [resolvable:$true] %s633
          %639 = dma.vmem_to_hbm [thread:$0]  %s634, 1024, %s632, %s619, 64, 64, 4
        $region36: #{conv2d.1} parent=31 // pred_fallthru
          _
      $region32: #{conv2d.1} parent=5 // pred_fallthru
        _
      %p640 = scmp.le.s32.totalorder 2, %s12
      // Predicated region
      $region37: #{conv2d.1} parent=5 // pred_check
        %p641 = pneg %p640
      $region38: #{conv2d.1} parent=5 // pred_check_branch
        %643 = sbr.rel (%p641) target = $region40
      $region39: #{conv2d.1} parent=5 // pred_region
        %s644 = ssub.s32 %s12, 2
        // Predicated region
        $region41: #{conv2d.1} parent=39 // pred_check
          %p645 = pneg %p133
        $region42: #{conv2d.1} parent=39 // pred_check_branch
          %647 = sbr.rel (%p645) target = $region44
        $region43: #{conv2d.1} parent=39 // pred_region
          %s648 = sand.u32 %s118, 1
          %s649 = scalar_lea.sflag [#allocation3], %s648
          %s650 = sand.u32 %s118, 1
          %s651 = smul.addr %s650, 64
          %s652 = scalar_lea.vmem [#allocation2], %s651
          %653 = dma.done %s649, 1024
        $region44: #{conv2d.1} parent=39 // pred_fallthru
          _
      $region40: #{conv2d.1} parent=5 // pred_fallthru
        _
    $region6: #{conv2d.1} parent=1 // loop_footer
      %s16 = sadd.s32 1, %s12
    $region7: #{conv2d.1} parent=1 // loop_footer_branch
      %11 = sbr.rel target = $region3
    $region8: #{conv2d.1} parent=1 // loop_exit
      _
    %654 = vsyncpa [#allocation3], 1
    %s655 = scalar_lea.sflag [#allocation3], 1
    %656 = vsyncpa %s655, 1

</llo_original>
